<compile_context>
chip_gen: v6e
topology: v6e:2x2x1
jax: 0.10.0
libtpu: 0.0.40
codegen_flags: <defaults>
</compile_context>

<pallas_src>
import functools

import numpy as np
import jax
import jax.numpy as jnp
from jax.experimental import pallas as pl
from jax.experimental.pallas import tpu as pltpu


def _grid_gram_loss_kernel(g_ref, theta_ref, theta_gt_ref, out_ref, *, inv_scale):
    # g_ref        : (6,)   f32 SMEM  -- [G00, G01, G02, G11, G12, G22]
    # theta_ref    : (6, B) f32 VMEM  -- params lane-dense over batch
    # theta_gt_ref : (6, B) f32 VMEM
    # out_ref      : (1, 1) f32 SMEM
    def drow(r):
        # (1, B) row of dTheta = theta - theta_gt  (static sublane slice of refs)
        return theta_ref[r:r + 1, :] - theta_gt_ref[r:r + 1, :]

    d00, d01, dtx = drow(0), drow(1), drow(2)   # x-row of dTheta (2,3)
    d10, d11, dty = drow(3), drow(4), drow(5)   # y-row of dTheta (2,3)

    g00, g01, g02 = g_ref[0], g_ref[1], g_ref[2]
    g11, g12, g22 = g_ref[3], g_ref[4], g_ref[5]

    # Per-batch contribution: tr(D G D^T) with symmetric 3x3 G, evaluated
    # elementwise across batch lanes.
    per_b = (g00 * (d00 * d00 + d10 * d10)
             + g11 * (d01 * d01 + d11 * d11)
             + g22 * (dtx * dtx + dty * dty)
             + (2.0 * g01) * (d00 * d01 + d10 * d11)
             + (2.0 * g02) * (d00 * dtx + d10 * dty)
             + (2.0 * g12) * (d01 * dtx + d11 * dty))      # (1, B)

    out_ref[0, 0] = jnp.sum(per_b) * jnp.float32(inv_scale)


def transformed_grid_loss(theta, theta_gt, gram6, n_points):
    """theta, theta_gt: (B, 6) affine params; gram6: (6,) Gram entries; n_points: N."""
    B = theta.shape[0]
    theta_t = jnp.transpose(theta.astype(jnp.float32))        # (6, B) lane-dense
    theta_gt_t = jnp.transpose(theta_gt.astype(jnp.float32))  # (6, B)

    kernel = functools.partial(_grid_gram_loss_kernel,
                               inv_scale=1.0 / float(B * n_points))
    out = pl.pallas_call(
        kernel,
        out_shape=jax.ShapeDtypeStruct((1, 1), jnp.float32),
        in_specs=[
            pl.BlockSpec(memory_space=pltpu.MemorySpace.SMEM),   # Gram entries
            pl.BlockSpec(memory_space=pltpu.MemorySpace.VMEM),   # theta   (6, B)
            pl.BlockSpec(memory_space=pltpu.MemorySpace.VMEM),   # theta_gt(6, B)
        ],
        out_specs=pl.BlockSpec(memory_space=pltpu.MemorySpace.SMEM),
        cost_estimate=pl.CostEstimate(
            flops=48 * B + 8, transcendentals=0,
            bytes_accessed=2 * 6 * B * 4 + 6 * 4 + 4),
    )(gram6, theta_t, theta_gt_t)
    return out[0, 0]


def make_grid_gram(grid_size=20):
    """Precompute the fixed grid's 3x3 Gram matrix (host-side, once).

    Matches the module __init__: meshgrid of linspace(-1, 1, grid_size),
    X then Y concatenated along the coord axis.
    Returns (gram6, P, N): gram6 = [G00, G01, G02, G11, G12, G22] f32,
    P = (2, N) f32 grid (kept only for the pure-JAX reference check).
    """
    axis_coords = np.linspace(-1.0, 1.0, grid_size)
    X, Y = np.meshgrid(axis_coords, axis_coords)
    n = grid_size * grid_size
    Px = np.reshape(X, (n,)).astype(np.float64)
    Py = np.reshape(Y, (n,)).astype(np.float64)
    P_aug = np.stack([Px, Py, np.ones((n,), dtype=np.float64)], axis=0)  # (3, N)
    G = P_aug @ P_aug.T                                                  # (3, 3)
    gram6 = np.array([G[0, 0], G[0, 1], G[0, 2],
                      G[1, 1], G[1, 2], G[2, 2]], dtype=np.float32)
    P = np.stack([Px, Py], axis=0).astype(np.float32)                    # (2, N)
    return jnp.asarray(gram6), jnp.asarray(P), n


def reference_loss(theta, theta_gt, P):
    # Pure-JAX reference of the PyTorch forward (affine), P: (2, N).
    B = theta.shape[0]
    th = theta.reshape(B, 2, 3)
    thg = theta_gt.reshape(B, 2, 3)
    Pp = jnp.einsum('bij,jn->bin', th[:, :, :2], P) + th[:, :, 2][:, :, None]
    Ppg = jnp.einsum('bij,jn->bin', thg[:, :, :2], P) + thg[:, :, 2][:, :, None]
    return jnp.mean(jnp.sum((Pp - Ppg) ** 2, axis=1))


if __name__ == "__main__":
    grid_size = 20
    batch = 2

    key = jax.random.PRNGKey(0)
    k1, k2 = jax.random.split(key)
    # theta near identity affine [1,0,0, 0,1,0] plus noise; gt is another sample.
    identity = jnp.array([1.0, 0.0, 0.0, 0.0, 1.0, 0.0], dtype=jnp.float32)
    theta = identity[None, :] + 0.1 * jax.random.normal(k1, (batch, 6), jnp.float32)
    theta_gt = identity[None, :] + 0.1 * jax.random.normal(k2, (batch, 6), jnp.float32)

    gram6, P, n_points = make_grid_gram(grid_size)     # (6,), (2, 400), 400

    loss = transformed_grid_loss(theta, theta_gt, gram6, n_points)
    loss = jax.block_until_ready(loss)

    ref = reference_loss(theta, theta_gt, P)
    assert jnp.allclose(loss, ref, rtol=1e-4, atol=1e-7), (loss, ref)

    print("KERNEL_OK")
</pallas_src>

<mosaic_0001>
module attributes {stable_mosaic.version = 11 : i64} {
  func.func @_grid_gram_loss_kernel(%arg0: memref<6xf32, #tpu.memory_space<smem>>, %arg1: memref<6x2xf32, #tpu.memory_space<vmem>>, %arg2: memref<6x2xf32, #tpu.memory_space<vmem>>, %arg3: memref<1x1xf32, #tpu.memory_space<smem>>) attributes {dimension_semantics = [], scalar_prefetch = 0 : i64, scratch_operands = 0 : i64, tpu.core_type = #tpu.core_type<tc>} {
    %c0 = arith.constant 0 : index
    %c0_0 = arith.constant 0 : index
    %0 = vector.load %arg1[%c0, %c0_0] : memref<6x2xf32, #tpu.memory_space<vmem>>, vector<1x2xf32>
    %c0_1 = arith.constant 0 : index
    %c0_2 = arith.constant 0 : index
    %1 = vector.load %arg2[%c0_1, %c0_2] : memref<6x2xf32, #tpu.memory_space<vmem>>, vector<1x2xf32>
    %2 = arith.subf %0, %1 : vector<1x2xf32>
    %c1 = arith.constant 1 : index
    %c0_3 = arith.constant 0 : index
    %3 = vector.load %arg1[%c1, %c0_3] : memref<6x2xf32, #tpu.memory_space<vmem>>, vector<1x2xf32>
    %c1_4 = arith.constant 1 : index
    %c0_5 = arith.constant 0 : index
    %4 = vector.load %arg2[%c1_4, %c0_5] : memref<6x2xf32, #tpu.memory_space<vmem>>, vector<1x2xf32>
    %5 = arith.subf %3, %4 : vector<1x2xf32>
    %c2 = arith.constant 2 : index
    %c0_6 = arith.constant 0 : index
    %6 = vector.load %arg1[%c2, %c0_6] : memref<6x2xf32, #tpu.memory_space<vmem>>, vector<1x2xf32>
    %c2_7 = arith.constant 2 : index
    %c0_8 = arith.constant 0 : index
    %7 = vector.load %arg2[%c2_7, %c0_8] : memref<6x2xf32, #tpu.memory_space<vmem>>, vector<1x2xf32>
    %8 = arith.subf %6, %7 : vector<1x2xf32>
    %c3 = arith.constant 3 : index
    %c0_9 = arith.constant 0 : index
    %9 = vector.load %arg1[%c3, %c0_9] : memref<6x2xf32, #tpu.memory_space<vmem>>, vector<1x2xf32>
    %c3_10 = arith.constant 3 : index
    %c0_11 = arith.constant 0 : index
    %10 = vector.load %arg2[%c3_10, %c0_11] : memref<6x2xf32, #tpu.memory_space<vmem>>, vector<1x2xf32>
    %11 = arith.subf %9, %10 : vector<1x2xf32>
    %c4 = arith.constant 4 : index
    %c0_12 = arith.constant 0 : index
    %12 = vector.load %arg1[%c4, %c0_12] : memref<6x2xf32, #tpu.memory_space<vmem>>, vector<1x2xf32>
    %c4_13 = arith.constant 4 : index
    %c0_14 = arith.constant 0 : index
    %13 = vector.load %arg2[%c4_13, %c0_14] : memref<6x2xf32, #tpu.memory_space<vmem>>, vector<1x2xf32>
    %14 = arith.subf %12, %13 : vector<1x2xf32>
    %c5 = arith.constant 5 : index
    %c0_15 = arith.constant 0 : index
    %15 = vector.load %arg1[%c5, %c0_15] : memref<6x2xf32, #tpu.memory_space<vmem>>, vector<1x2xf32>
    %c5_16 = arith.constant 5 : index
    %c0_17 = arith.constant 0 : index
    %16 = vector.load %arg2[%c5_16, %c0_17] : memref<6x2xf32, #tpu.memory_space<vmem>>, vector<1x2xf32>
    %17 = arith.subf %15, %16 : vector<1x2xf32>
    %c0_18 = arith.constant 0 : index
    %18 = memref.load %arg0[%c0_18] : memref<6xf32, #tpu.memory_space<smem>>
    %c1_19 = arith.constant 1 : index
    %19 = memref.load %arg0[%c1_19] : memref<6xf32, #tpu.memory_space<smem>>
    %c2_20 = arith.constant 2 : index
    %20 = memref.load %arg0[%c2_20] : memref<6xf32, #tpu.memory_space<smem>>
    %c3_21 = arith.constant 3 : index
    %21 = memref.load %arg0[%c3_21] : memref<6xf32, #tpu.memory_space<smem>>
    %c4_22 = arith.constant 4 : index
    %22 = memref.load %arg0[%c4_22] : memref<6xf32, #tpu.memory_space<smem>>
    %c5_23 = arith.constant 5 : index
    %23 = memref.load %arg0[%c5_23] : memref<6xf32, #tpu.memory_space<smem>>
    %24 = arith.mulf %2, %2 : vector<1x2xf32>
    %25 = arith.mulf %11, %11 : vector<1x2xf32>
    %26 = arith.addf %24, %25 : vector<1x2xf32>
    %27 = vector.broadcast %18 : f32 to vector<1x2xf32>
    %28 = arith.mulf %27, %26 : vector<1x2xf32>
    %29 = arith.mulf %5, %5 : vector<1x2xf32>
    %30 = arith.mulf %14, %14 : vector<1x2xf32>
    %31 = arith.addf %29, %30 : vector<1x2xf32>
    %32 = vector.broadcast %21 : f32 to vector<1x2xf32>
    %33 = arith.mulf %32, %31 : vector<1x2xf32>
    %34 = arith.addf %28, %33 : vector<1x2xf32>
    %35 = arith.mulf %8, %8 : vector<1x2xf32>
    %36 = arith.mulf %17, %17 : vector<1x2xf32>
    %37 = arith.addf %35, %36 : vector<1x2xf32>
    %38 = vector.broadcast %23 : f32 to vector<1x2xf32>
    %39 = arith.mulf %38, %37 : vector<1x2xf32>
    %40 = arith.addf %34, %39 : vector<1x2xf32>
    %cst = arith.constant 2.000000e+00 : f32
    %41 = arith.mulf %cst, %19 : f32
    %42 = arith.mulf %2, %5 : vector<1x2xf32>
    %43 = arith.mulf %11, %14 : vector<1x2xf32>
    %44 = arith.addf %42, %43 : vector<1x2xf32>
    %45 = vector.broadcast %41 : f32 to vector<1x2xf32>
    %46 = arith.mulf %45, %44 : vector<1x2xf32>
    %47 = arith.addf %40, %46 : vector<1x2xf32>
    %cst_24 = arith.constant 2.000000e+00 : f32
    %48 = arith.mulf %cst_24, %20 : f32
    %49 = arith.mulf %2, %8 : vector<1x2xf32>
    %50 = arith.mulf %11, %17 : vector<1x2xf32>
    %51 = arith.addf %49, %50 : vector<1x2xf32>
    %52 = vector.broadcast %48 : f32 to vector<1x2xf32>
    %53 = arith.mulf %52, %51 : vector<1x2xf32>
    %54 = arith.addf %47, %53 : vector<1x2xf32>
    %cst_25 = arith.constant 2.000000e+00 : f32
    %55 = arith.mulf %cst_25, %22 : f32
    %56 = arith.mulf %5, %8 : vector<1x2xf32>
    %57 = arith.mulf %14, %17 : vector<1x2xf32>
    %58 = arith.addf %56, %57 : vector<1x2xf32>
    %59 = vector.broadcast %55 : f32 to vector<1x2xf32>
    %60 = arith.mulf %59, %58 : vector<1x2xf32>
    %61 = arith.addf %54, %60 : vector<1x2xf32>
    %62 = vector.shape_cast %61 : vector<1x2xf32> to vector<1x1x2xf32>
    %cst_26 = arith.constant dense<0.000000e+00> : vector<1xf32>
    %63 = vector.multi_reduction <add>, %62, %cst_26 [1, 2] : vector<1x1x2xf32> to vector<1xf32>
    %64 = vector.shape_cast %63 : vector<1xf32> to vector<1x1x1xf32>
    %65 = vector.extract %64[0, 0, 0] : f32 from vector<1x1x1xf32>
    %cst_27 = arith.constant 1.250000e-03 : f32
    %66 = arith.mulf %65, %cst_27 : f32
    %c0_28 = arith.constant 0 : index
    %c0_29 = arith.constant 0 : index
    %67 = memref.load %arg3[%c0_28, %c0_29] : memref<1x1xf32, #tpu.memory_space<smem>>
    memref.store %66, %arg3[%c0_28, %c0_29] : memref<1x1xf32, #tpu.memory_space<smem>>
    return
  }
}

</mosaic_0001>

<llo_original>
// kernel: tpu_custom_call.1
$region0: #{tpu_custom_call.1}
  #allocation0 [shape = 'u32[]', space=smem, size = 0x4, offset = 0x4, fixed_abs, tag = 'smem constant byte address 0x4 - core index']
  #allocation1 [shape = 'u32[144,128]{1,0:T(1,128)}', space=vmem, size = 0x12000, scoped, tag = 'internal scratch']
  %s0 = inlined_call_operand.vmem [shape: f32[6], index: 0, kind: input, shape index: {}]
  %s1 = inlined_call_operand.vmem [shape: f32[6,2], index: 1, kind: input, shape index: {}]
  %s2 = inlined_call_operand.vmem [shape: f32[6,2], index: 2, kind: input, shape index: {}]
  %s3 = inlined_call_operand.hbm [shape: f32[1,1], index: 3, kind: output, shape index: {}]
  %s4 = sld [smem:[#allocation0]]
  $region26: #{tpu_custom_call.1} parent=0
    _
  %s6 = ssub.s32 1, %s4
  %s7 = scalar_select 0, %s6, %s4
  $region1: #{tpu_custom_call.1} parent=0
    #allocation2 [shape = 'u8[512]{0}', space=smem, size = 0x200, scoped, tag = 'input window, operand 0, single buffered']
    #allocation3 [shape = 's32[1]{0}', space=sflag, size = 0x4, scoped, tag = 'scoped memory for tpu_custom_call.1']
    #allocation4 [shape = 's32[1]{0}', space=sflag, size = 0x4, scoped, tag = 'scoped memory for tpu_custom_call.1']
    #allocation5 [shape = 'u8[512]{0}', space=smem, size = 0x200, scoped, tag = 'output window, operand 0, single buffered']
    %8 = vsyncpa [#allocation4], 0
    %9 = vsyncpa [#allocation3], 0
    // Predicated region
    $region2: #{tpu_custom_call.1} parent=1 // pred_check
      _
    $region3: #{tpu_custom_call.1} parent=1 // pred_check_branch
      %11 = sbr.rel (0) target = $region5
    $region4: #{tpu_custom_call.1} parent=1 // pred_region
      %s13 = ssub.s32 16, 16
      %14 = vsyncadd [#allocation4], %s13
      %s16 = sshll.u32 %s0, 4
      %s17 = int_to_ptr.vmem [resolvable:$true] %s16
      %19 = dma.vmem_to_smem %s17, 16, [#allocation2], [#allocation4]
    $region5: #{tpu_custom_call.1} parent=1 // pred_fallthru
      _
    // Predicated region
    $region6: #{tpu_custom_call.1} parent=1 // pred_check
      _
    $region7: #{tpu_custom_call.1} parent=1 // pred_check_branch
      %21 = sbr.rel (0) target = $region9
    $region8: #{tpu_custom_call.1} parent=1 // pred_region
      _
    $region9: #{tpu_custom_call.1} parent=1 // pred_fallthru
      _
    // Predicated region
    $region10: #{tpu_custom_call.1} parent=1 // pred_check
      _
    $region11: #{tpu_custom_call.1} parent=1 // pred_check_branch
      %23 = sbr.rel (0) target = $region13
    $region12: #{tpu_custom_call.1} parent=1 // pred_region
      _
    $region13: #{tpu_custom_call.1} parent=1 // pred_fallthru
      _
    // Predicated region
    $region14: #{tpu_custom_call.1} parent=1 // pred_check
      _
    $region15: #{tpu_custom_call.1} parent=1 // pred_check_branch
      %25 = sbr.rel (0) target = $region17
    $region16: #{tpu_custom_call.1} parent=1 // pred_region
      %26 = dma.done [#allocation4], 16
    $region17: #{tpu_custom_call.1} parent=1 // pred_fallthru
      _
    %27 = sfence
    %v28 = vld [vmem:[%s1] sm:$0x1]
    %v29 = vld [vmem:[%s2] sm:$0x1]
    %v30 = vsub.f32 %v28, %v29
    %v31 = vld [vmem:[%s1 + $0x1] sm:$0x1]
    %v32 = vld [vmem:[%s2 + $0x1] sm:$0x1]
    %v33 = vsub.f32 %v31, %v32
    %v34 = vld [vmem:[%s1 + $0x2] sm:$0x1]
    %v35 = vld [vmem:[%s2 + $0x2] sm:$0x1]
    %v36 = vsub.f32 %v34, %v35
    %v37 = vld [vmem:[%s1 + $0x3] sm:$0x1]
    %v38 = vld [vmem:[%s2 + $0x3] sm:$0x1]
    %v39 = vsub.f32 %v37, %v38
    %v40 = vld [vmem:[%s1 + $0x4] sm:$0x1]
    %v41 = vld [vmem:[%s2 + $0x4] sm:$0x1]
    %v42 = vsub.f32 %v40, %v41
    %v43 = vld [vmem:[%s1 + $0x5] sm:$0x1]
    %v44 = vld [vmem:[%s2 + $0x5] sm:$0x1]
    %v45 = vsub.f32 %v43, %v44
    %s46 = sld [smem:[#allocation2]]
    %s47 = sld [smem:[#allocation2 + $0x1]]
    %s48 = sld [smem:[#allocation2 + $0x2]]
    %s49 = sld [smem:[#allocation2 + $0x3]]
    %s50 = sld [smem:[#allocation2 + $0x4]]
    %s51 = sld [smem:[#allocation2 + $0x5]]
    %v52 = vmul.f32 %v30, %v30
    %v53 = vmul.f32 %v39, %v39
    %v54 = vadd.f32 %v52, %v53
    %v55 = vstv %s46
    %v56 = vmul.f32 %v55, %v54
    %v57 = vmul.f32 %v33, %v33
    %v58 = vmul.f32 %v42, %v42
    %v59 = vadd.f32 %v57, %v58
    %v60 = vstv %s49
    %v61 = vmul.f32 %v60, %v59
    %v62 = vadd.f32 %v56, %v61
    %v63 = vmul.f32 %v36, %v36
    %v64 = vmul.f32 %v45, %v45
    %v65 = vadd.f32 %v63, %v64
    %v66 = vstv %s51
    %v67 = vmul.f32 %v66, %v65
    %v68 = vadd.f32 %v62, %v67
    %s69 = smul.f32 %s47, 2.0
    %v70 = vmul.f32 %v30, %v33
    %v71 = vmul.f32 %v39, %v42
    %v72 = vadd.f32 %v70, %v71
    %v73 = vstv %s69
    %v74 = vmul.f32 %v73, %v72
    %v75 = vadd.f32 %v68, %v74
    %s76 = smul.f32 %s48, 2.0
    %v77 = vmul.f32 %v30, %v36
    %v78 = vmul.f32 %v39, %v45
    %v79 = vadd.f32 %v77, %v78
    %v80 = vstv %s76
    %v81 = vmul.f32 %v80, %v79
    %v82 = vadd.f32 %v75, %v81
    %s83 = smul.f32 %s50, 2.0
    %v84 = vmul.f32 %v33, %v36
    %v85 = vmul.f32 %v42, %v45
    %v86 = vadd.f32 %v84, %v85
    %v87 = vstv %s83
    %v88 = vmul.f32 %v87, %v86
    %v89 = vadd.f32 %v82, %v88
    %vm90 = vcmask 8192
    %v91 = vsel %vm90, %v89, 0.0
    %92 = vadd.xlane.f32.xlu0 %v91
    %v93 = vpop.xlane.xlu0 %92
    %v94 = vrot.slane %v93, 4
    %v95 = vadd.f32 %v93, %v94
    %v96 = vrot.slane %v95, 2
    %v97 = vadd.f32 %v95, %v96
    %v98 = vrot.slane %v97, 1
    %v99 = vadd.f32 %v97, %v98
    %s100 = vtos %v99
    %s101 = smul.f32 %s100, 0.00125
    %s102 = scalar_lea.smem [#allocation5], 0
    %103 = sst [smem:[%s102]] %s101
    // Predicated region
    $region18: #{tpu_custom_call.1} parent=1 // pred_check
      _
    $region19: #{tpu_custom_call.1} parent=1 // pred_check_branch
      %105 = sbr.rel (0) target = $region21
    $region20: #{tpu_custom_call.1} parent=1 // pred_region
      %s107 = ssub.s32 16, 16
      %108 = vsyncadd [#allocation3], %s107
      %111 = dma.smem_to_hbm [#allocation5], 16, %s3, [#allocation3]
    $region21: #{tpu_custom_call.1} parent=1 // pred_fallthru
      _
    // Predicated region
    $region22: #{tpu_custom_call.1} parent=1 // pred_check
      _
    $region23: #{tpu_custom_call.1} parent=1 // pred_check_branch
      %113 = sbr.rel (0) target = $region25
    $region24: #{tpu_custom_call.1} parent=1 // pred_region
      %114 = dma.done [#allocation3], 16
    $region25: #{tpu_custom_call.1} parent=1 // pred_fallthru
      _
    %115 = sfence
    %116 = vsyncpa [#allocation3], 1
    %117 = vsyncpa [#allocation4], 1

</llo_original>
